<compile_context>
chip_gen: v6e
topology: v6e:2x2x1
jax: 0.10.0
libtpu: 0.0.40
codegen_flags: <defaults>
</compile_context>

<pallas_src>
import functools

import jax
import jax.numpy as jnp
from jax.experimental import pallas as pl
from jax.experimental.pallas import tpu as pltpu


def _round_up(x, m):
    return ((x + m - 1) // m) * m


# ----------------------------------------------------------------------------
# Pallas kernel: fused classification head
#   out = Linear2( Dropout( ReLU( Linear1( tanh(fused_pre) ) ) ) )
# ----------------------------------------------------------------------------
def _vqa_head_kernel(seed_ref, x_ref, w1_ref, b1_ref, w2_ref, b2_ref, out_ref,
                     *, dropout_p, training, apply_tanh):
    x = x_ref[...]                                   # [TB, Di+Dt] f32
    if apply_tanh:
        # Fused stub-backbone epilogue (EUP op, stays f32 for v5e).
        x = jnp.tanh(x)

    # Linear1 on the MXU: bf16 inputs, f32 accumulation. Bias/ReLU in f32.
    h = jnp.dot(x.astype(jnp.bfloat16), w1_ref[...],
                preferred_element_type=jnp.float32)
    h = jnp.maximum(h + b1_ref[...], 0.0)

    if training and dropout_p > 0.0:
        # Inverted dropout: raw uint32 bits vs. a precomputed uint32 threshold
        # (no int->float convert, single select). Seed offset per grid step.
        pltpu.prng_seed(seed_ref[0] + pl.program_id(0))
        bits = pltpu.bitcast(pltpu.prng_random_bits(h.shape), jnp.uint32)
        thresh = jnp.uint32(int(dropout_p * float(1 << 32)))
        h = jnp.where(bits >= thresh, h * (1.0 / (1.0 - dropout_p)), 0.0)

    # Linear2 on the MXU: bf16 inputs, f32 accumulation. Store the padded,
    # lane-dense slab; the wrapper slices back to num_classes.
    out = jnp.dot(h.astype(jnp.bfloat16), w2_ref[...],
                  preferred_element_type=jnp.float32) + b2_ref[...]
    out_ref[...] = out


def vqa_head(fused_pre, params, *, dropout_p=0.3, training=False, seed=0,
             block_b=8, apply_tanh=True):
    """Pallas fc head over pre-activation fused features [B, Di+Dt]."""
    B, Din = fused_pre.shape
    w1, b1, w2, b2 = params["w1"], params["b1"], params["w2"], params["b2"]
    H = w1.shape[1]
    C = w2.shape[1]

    # Lane-dense padding (multiples of 128) for hidden & class dims; batch
    # rounded up to the sublane tile so the grid covers it exactly.
    Hp = _round_up(H, 128)
    Cp = _round_up(C, 128)
    Bp = _round_up(B, block_b)

    x_p = jnp.pad(fused_pre, ((0, Bp - B), (0, 0)))                       # f32
    w1_p = jnp.pad(w1, ((0, 0), (0, Hp - H))).astype(jnp.bfloat16)
    b1_p = jnp.pad(b1, (0, Hp - H)).reshape(1, Hp).astype(jnp.float32)
    w2_p = jnp.pad(w2, ((0, Hp - H), (0, Cp - C))).astype(jnp.bfloat16)
    b2_p = jnp.pad(b2, (0, Cp - C)).reshape(1, Cp).astype(jnp.float32)
    seed_arr = jnp.asarray([seed], dtype=jnp.int32)

    kernel = functools.partial(_vqa_head_kernel, dropout_p=dropout_p,
                               training=training, apply_tanh=apply_tanh)

    grid_spec = pltpu.PrefetchScalarGridSpec(
        num_scalar_prefetch=1,                      # dropout seed lives in SMEM
        grid=(Bp // block_b,),
        in_specs=[
            pl.BlockSpec((block_b, Din), lambda b, seed: (b, 0)),   # activations
            pl.BlockSpec((Din, Hp), lambda b, seed: (0, 0)),        # w1 (resident)
            pl.BlockSpec((1, Hp), lambda b, seed: (0, 0)),          # b1 (resident)
            pl.BlockSpec((Hp, Cp), lambda b, seed: (0, 0)),         # w2 (resident)
            pl.BlockSpec((1, Cp), lambda b, seed: (0, 0)),          # b2 (resident)
        ],
        out_specs=pl.BlockSpec((block_b, Cp), lambda b, seed: (b, 0)),
    )

    out_p = pl.pallas_call(
        kernel,
        out_shape=jax.ShapeDtypeStruct((Bp, Cp), jnp.float32),
        grid_spec=grid_spec,
        compiler_params=pltpu.CompilerParams(
            dimension_semantics=("parallel",)),     # megacore sharding on v7x
    )(seed_arr, x_p, w1_p, b1_p, w2_p, b2_p)

    return out_p[:B, :C]


# ----------------------------------------------------------------------------
# Deterministic stub backbones (plain JAX glue, see TODO(synk) above).
# They return PRE-tanh features; the tanh epilogue is fused into the kernel.
# ----------------------------------------------------------------------------
def stub_vit_cls_pre(image_nchw, w_patch):
    """image [B, C, H, W] -> pre-activation CLS-like feature [B, image_dim]."""
    B = image_nchw.shape[0]
    return image_nchw.reshape(B, -1) @ w_patch


def stub_bert_cls_pre(input_ids, attention_mask, embed_table):
    """input_ids [B, S], mask [B, S] -> pre-activation CLS-like [B, text_dim]."""
    emb = embed_table[input_ids]                               # [B, S, Dt]
    mask = attention_mask[..., None].astype(jnp.float32)       # [B, S, 1]
    return (emb * mask).sum(axis=1) / jnp.maximum(mask.sum(axis=1), 1.0)


# ----------------------------------------------------------------------------
# End-to-end forward (stub backbones in JAX + Pallas head)
# ----------------------------------------------------------------------------
def vqa_forward(image, input_ids, attention_mask, params, *, training=False,
                seed=0):
    img_pre = stub_vit_cls_pre(image, params["w_patch"])
    txt_pre = stub_bert_cls_pre(input_ids, attention_mask, params["embed"])
    fused_pre = jnp.concatenate([img_pre, txt_pre], axis=1)
    return vqa_head(fused_pre, params, dropout_p=0.3, training=training,
                    seed=seed)


if __name__ == "__main__":
    # Small shapes consistent with the module's forward.
    B, CH, HW = 2, 3, 16          # image: [2, 3, 16, 16] (NCHW)
    SEQ, VOCAB = 8, 50            # text: [2, 8]
    IMAGE_DIM, TEXT_DIM = 32, 32  # vit/bert hidden sizes (stub)
    HIDDEN_DIM, NUM_CLASSES = 64, 10

    key = jax.random.PRNGKey(0)
    k = jax.random.split(key, 8)

    params = {
        # stub backbone params
        "w_patch": 0.02 * jax.random.normal(k[0], (CH * HW * HW, IMAGE_DIM), jnp.float32),
        "embed":   0.02 * jax.random.normal(k[1], (VOCAB, TEXT_DIM), jnp.float32),
        # fc head params (same shapes as the nn.Sequential in VQAModel)
        "w1": 0.05 * jax.random.normal(k[2], (IMAGE_DIM + TEXT_DIM, HIDDEN_DIM), jnp.float32),
        "b1": 0.01 * jax.random.normal(k[3], (HIDDEN_DIM,), jnp.float32),
        "w2": 0.05 * jax.random.normal(k[4], (HIDDEN_DIM, NUM_CLASSES), jnp.float32),
        "b2": 0.01 * jax.random.normal(k[5], (NUM_CLASSES,), jnp.float32),
    }

    image = jax.random.normal(k[6], (B, CH, HW, HW), jnp.float32)
    input_ids = jax.random.randint(k[7], (B, SEQ), 0, VOCAB, jnp.int32)
    attention_mask = jnp.ones((B, SEQ), jnp.int32)

    out = vqa_forward(image, input_ids, attention_mask, params, training=False)
    out = jax.block_until_ready(out)
    assert out.shape == (B, NUM_CLASSES)

    # Pure-JAX references (eval mode: dropout is identity).
    img_feat = jnp.tanh(stub_vit_cls_pre(image, params["w_patch"]))
    txt_feat = jnp.tanh(stub_bert_cls_pre(input_ids, attention_mask, params["embed"]))
    fused = jnp.concatenate([img_feat, txt_feat], axis=1)

    # (a) Mirrored-precision reference (bf16 matmul inputs, f32 accumulation).
    h_ref = jnp.maximum(
        jnp.dot(fused.astype(jnp.bfloat16), params["w1"].astype(jnp.bfloat16),
                preferred_element_type=jnp.float32) + params["b1"], 0.0)
    ref_bf16 = jnp.dot(h_ref.astype(jnp.bfloat16),
                       params["w2"].astype(jnp.bfloat16),
                       preferred_element_type=jnp.float32) + params["b2"]
    assert jnp.allclose(out, ref_bf16, atol=1e-3, rtol=1e-3), "mismatch vs bf16 reference"

    # (b) Full-f32 reference, loose tolerance (bf16 rounding only).
    ref_f32 = (jnp.maximum(fused @ params["w1"] + params["b1"], 0.0)
               @ params["w2"] + params["b2"])
    assert jnp.allclose(out, ref_f32, atol=1e-1, rtol=1e-1), "mismatch vs f32 reference"

    print("KERNEL_OK")
</pallas_src>

<mosaic_0001>
module attributes {stable_mosaic.version = 11 : i64} {
  func.func @_vqa_head_kernel(%arg0: i32, %arg1: memref<1xi32, #tpu.memory_space<smem>>, %arg2: memref<8x64xf32, #tpu.memory_space<vmem>>, %arg3: memref<64x128xbf16, #tpu.memory_space<vmem>>, %arg4: memref<1x128xf32, #tpu.memory_space<vmem>>, %arg5: memref<128x128xbf16, #tpu.memory_space<vmem>>, %arg6: memref<1x128xf32, #tpu.memory_space<vmem>>, %arg7: memref<8x128xf32, #tpu.memory_space<vmem>>) attributes {dimension_semantics = [#tpu.dimension_semantics<parallel>], iteration_bounds = array<i64: 1>, scalar_prefetch = 1 : i64, scratch_operands = 0 : i64, tpu.core_type = #tpu.core_type<tc>, window_params = [{transform_indices = @transform_0, window_bounds = array<i64: 8, 64>}, {pipeline_mode = #tpu.pipeline_mode<synchronous>, transform_indices = @transform_1, window_bounds = array<i64: 64, 128>}, {pipeline_mode = #tpu.pipeline_mode<synchronous>, transform_indices = @transform_2, window_bounds = array<i64: 1, 128>}, {pipeline_mode = #tpu.pipeline_mode<synchronous>, transform_indices = @transform_3, window_bounds = array<i64: 128, 128>}, {pipeline_mode = #tpu.pipeline_mode<synchronous>, transform_indices = @transform_4, window_bounds = array<i64: 1, 128>}, {transform_indices = @transform_5, window_bounds = array<i64: 8, 128>}]} {
    %c0 = arith.constant 0 : index
    %c0_0 = arith.constant 0 : index
    %0 = vector.load %arg2[%c0, %c0_0] : memref<8x64xf32, #tpu.memory_space<vmem>>, vector<8x64xf32>
    %1 = math.tanh %0 : vector<8x64xf32>
    %2 = arith.truncf %1 : vector<8x64xf32> to vector<8x64xbf16>
    %c0_1 = arith.constant 0 : index
    %c0_2 = arith.constant 0 : index
    %3 = vector.load %arg3[%c0_1, %c0_2] : memref<64x128xbf16, #tpu.memory_space<vmem>>, vector<64x128xbf16>
    %cst = arith.constant dense<0.000000e+00> : vector<8x128xf32>
    %4 = tpu.matmul %2, %3, %cst {dimension_numbers = #tpu.dot_dimension_numbers<[1], [0], [0], [1], [0, 0, 1, 1], [], []>} : vector<8x64xbf16>, vector<64x128xbf16>, vector<8x128xf32> -> vector<8x128xf32>
    %c0_3 = arith.constant 0 : index
    %c0_4 = arith.constant 0 : index
    %5 = vector.load %arg4[%c0_3, %c0_4] : memref<1x128xf32, #tpu.memory_space<vmem>>, vector<1x128xf32>
    %6 = vector.broadcast %5 : vector<1x128xf32> to vector<8x128xf32>
    %7 = arith.addf %4, %6 : vector<8x128xf32>
    %cst_5 = arith.constant 0.000000e+00 : f32
    %8 = vector.broadcast %cst_5 : f32 to vector<8x128xf32>
    %9 = arith.maximumf %7, %8 : vector<8x128xf32>
    %10 = arith.truncf %9 : vector<8x128xf32> to vector<8x128xbf16>
    %c0_6 = arith.constant 0 : index
    %c0_7 = arith.constant 0 : index
    %11 = vector.load %arg5[%c0_6, %c0_7] : memref<128x128xbf16, #tpu.memory_space<vmem>>, vector<128x128xbf16>
    %cst_8 = arith.constant dense<0.000000e+00> : vector<8x128xf32>
    %12 = tpu.matmul %10, %11, %cst_8 {dimension_numbers = #tpu.dot_dimension_numbers<[1], [0], [0], [1], [0, 0, 1, 1], [], []>} : vector<8x128xbf16>, vector<128x128xbf16>, vector<8x128xf32> -> vector<8x128xf32>
    %c0_9 = arith.constant 0 : index
    %c0_10 = arith.constant 0 : index
    %13 = vector.load %arg6[%c0_9, %c0_10] : memref<1x128xf32, #tpu.memory_space<vmem>>, vector<1x128xf32>
    %14 = vector.broadcast %13 : vector<1x128xf32> to vector<8x128xf32>
    %15 = arith.addf %12, %14 : vector<8x128xf32>
    %c0_11 = arith.constant 0 : index
    %c0_12 = arith.constant 0 : index
    %16 = vector.load %arg7[%c0_11, %c0_12] : memref<8x128xf32, #tpu.memory_space<vmem>>, vector<8x128xf32>
    tpu.vector_store %arg7[%c0_11, %c0_12], %15 {strides = array<i32>} : memref<8x128xf32, #tpu.memory_space<vmem>>, vector<8x128xf32>,
    return
  }
  func.func @transform_0(%arg0: i32, %arg1: memref<1xi32, #tpu.memory_space<smem>>) -> (i32, i32) {
    %c0_i32 = arith.constant 0 : i32
    %c0_i32_0 = arith.constant 0 : i32
    return %arg0, %c0_i32 : i32, i32
  }
  func.func @transform_1(%arg0: i32, %arg1: memref<1xi32, #tpu.memory_space<smem>>) -> (i32, i32) {
    %c0_i32 = arith.constant 0 : i32
    %c0_i32_0 = arith.constant 0 : i32
    %c0_i32_1 = arith.constant 0 : i32
    return %c0_i32, %c0_i32_0 : i32, i32
  }
  func.func @transform_2(%arg0: i32, %arg1: memref<1xi32, #tpu.memory_space<smem>>) -> (i32, i32) {
    %c0_i32 = arith.constant 0 : i32
    %c0_i32_0 = arith.constant 0 : i32
    %c0_i32_1 = arith.constant 0 : i32
    return %c0_i32, %c0_i32_0 : i32, i32
  }
  func.func @transform_3(%arg0: i32, %arg1: memref<1xi32, #tpu.memory_space<smem>>) -> (i32, i32) {
    %c0_i32 = arith.constant 0 : i32
    %c0_i32_0 = arith.constant 0 : i32
    %c0_i32_1 = arith.constant 0 : i32
    return %c0_i32, %c0_i32_0 : i32, i32
  }
  func.func @transform_4(%arg0: i32, %arg1: memref<1xi32, #tpu.memory_space<smem>>) -> (i32, i32) {
    %c0_i32 = arith.constant 0 : i32
    %c0_i32_0 = arith.constant 0 : i32
    %c0_i32_1 = arith.constant 0 : i32
    return %c0_i32, %c0_i32_0 : i32, i32
  }
  func.func @transform_5(%arg0: i32, %arg1: memref<1xi32, #tpu.memory_space<smem>>) -> (i32, i32) {
    %c0_i32 = arith.constant 0 : i32
    %c0_i32_0 = arith.constant 0 : i32
    return %arg0, %c0_i32 : i32, i32
  }
}

</mosaic_0001>

<llo_original>
// kernel: tpu_custom_call.1
$region0: #{tpu_custom_call.1}
  #allocation0 [shape = 'u32[]', space=smem, size = 0x4, offset = 0x4, fixed_abs, tag = 'smem constant byte address 0x4 - core index']
  #allocation1 [shape = 'u32[144,128]{1,0:T(1,128)}', space=vmem, size = 0x12000, scoped, tag = 'internal scratch']
  #allocation2 [shape = 's32[1]{0}', space=sflag, size = 0x4, scoped, tag = 'scoped memory for tpu_custom_call.1']
  #allocation3 [shape = 's32[1]{0:T(128)S(6)}', space=smem, size = 0x200, scoped, tag = 'prefetched SMEM operand 0']
  %s0 = inlined_call_operand.<no memory space> [shape: s32[1], index: 0, kind: input, shape index: {}]
  %s1 = inlined_call_operand.hbm [shape: f32[8,64], index: 1, kind: input, shape index: {}]
  %s2 = inlined_call_operand.hbm [shape: bf16[64,128], index: 2, kind: input, shape index: {}]
  %s3 = inlined_call_operand.vmem [shape: f32[1,128], index: 3, kind: input, shape index: {}]
  %s4 = inlined_call_operand.hbm [shape: bf16[128,128], index: 4, kind: input, shape index: {}]
  %s5 = inlined_call_operand.vmem [shape: f32[1,128], index: 5, kind: input, shape index: {}]
  %s6 = inlined_call_operand.hbm [shape: f32[8,128], index: 6, kind: output, shape index: {}]
  %s7 = sld [smem:[#allocation0]]
  $region42: #{tpu_custom_call.1} parent=0
    _
  %s9 = ssub.s32 1, %s7
  %s10 = scalar_select 0, %s9, %s7
  %11 = sst [smem:[#allocation3]] %s0
  $region1: #{tpu_custom_call.1} parent=0
    #allocation4 [shape = 'u8[4096]{0}', space=vmem, size = 0x1000, scoped, tag = 'input window, operand 1, single buffered']
    #allocation5 [shape = 's32[1]{0}', space=sflag, size = 0x4, scoped, tag = 'scoped memory for tpu_custom_call.1']
    #allocation6 [shape = 's32[1]{0}', space=sflag, size = 0x4, scoped, tag = 'scoped memory for tpu_custom_call.1']
    #allocation7 [shape = 'u8[16384]{0}', space=vmem, size = 0x4000, scoped, tag = 'input window, operand 2, single buffered']
    #allocation8 [shape = 's32[1]{0}', space=sflag, size = 0x4, scoped, tag = 'scoped memory for tpu_custom_call.1']
    #allocation9 [shape = 'u8[32768]{0}', space=vmem, size = 0x8000, scoped, tag = 'input window, operand 4, single buffered']
    #allocation10 [shape = 'u8[4096]{0}', space=vmem, size = 0x1000, scoped, tag = 'output window, operand 0, single buffered']
    %12 = vsyncpa [#allocation5], 0
    %13 = vsyncpa [#allocation8], 0
    %14 = vsyncpa [#allocation6], 0
    // Predicated region
    $region2: #{tpu_custom_call.1} parent=1 // pred_check
      _
    $region3: #{tpu_custom_call.1} parent=1 // pred_check_branch
      %16 = sbr.rel (0) target = $region5
    $region4: #{tpu_custom_call.1} parent=1 // pred_region
      %s18 = ssub.s32 128, 128
      %19 = vsyncadd [#allocation5], %s18
      %s21 = sshll.u32 [#allocation4], 4
      %s22 = int_to_ptr.vmem [resolvable:$true] %s21
      %24 = dma.hbm_to_vmem [thread:$0]  %s1, 128, %s22, [#allocation5]
    $region5: #{tpu_custom_call.1} parent=1 // pred_fallthru
      _
    // Predicated region
    $region6: #{tpu_custom_call.1} parent=1 // pred_check
      _
    $region7: #{tpu_custom_call.1} parent=1 // pred_check_branch
      %26 = sbr.rel (0) target = $region9
    $region8: #{tpu_custom_call.1} parent=1 // pred_region
      %s28 = ssub.s32 512, 512
      %29 = vsyncadd [#allocation8], %s28
      %s30 = sshll.u32 [#allocation7], 4
      %s31 = int_to_ptr.vmem [resolvable:$true] %s30
      %36 = dma.hbm_to_vmem [thread:$0]  %s2, 512, %s31, [#allocation8], 64, 64, 4
    $region9: #{tpu_custom_call.1} parent=1 // pred_fallthru
      _
    // Predicated region
    $region10: #{tpu_custom_call.1} parent=1 // pred_check
      _
    $region11: #{tpu_custom_call.1} parent=1 // pred_check_branch
      %38 = sbr.rel (0) target = $region13
    $region12: #{tpu_custom_call.1} parent=1 // pred_region
      _
    $region13: #{tpu_custom_call.1} parent=1 // pred_fallthru
      _
    // Predicated region
    $region14: #{tpu_custom_call.1} parent=1 // pred_check
      _
    $region15: #{tpu_custom_call.1} parent=1 // pred_check_branch
      %40 = sbr.rel (0) target = $region17
    $region16: #{tpu_custom_call.1} parent=1 // pred_region
      %s42 = ssub.s32 1024, 1024
      %43 = vsyncadd [#allocation8], %s42
      %s44 = sshll.u32 [#allocation9], 4
      %s45 = int_to_ptr.vmem [resolvable:$true] %s44
      %50 = dma.hbm_to_vmem [thread:$0]  %s4, 1024, %s45, [#allocation8], 64, 64, 4
    $region17: #{tpu_custom_call.1} parent=1 // pred_fallthru
      _
    // Predicated region
    $region18: #{tpu_custom_call.1} parent=1 // pred_check
      _
    $region19: #{tpu_custom_call.1} parent=1 // pred_check_branch
      %52 = sbr.rel (0) target = $region21
    $region20: #{tpu_custom_call.1} parent=1 // pred_region
      _
    $region21: #{tpu_custom_call.1} parent=1 // pred_fallthru
      _
    // Predicated region
    $region22: #{tpu_custom_call.1} parent=1 // pred_check
      _
    $region23: #{tpu_custom_call.1} parent=1 // pred_check_branch
      %54 = sbr.rel (0) target = $region25
    $region24: #{tpu_custom_call.1} parent=1 // pred_region
      %55 = dma.done [#allocation5], 128
    $region25: #{tpu_custom_call.1} parent=1 // pred_fallthru
      _
    // Predicated region
    $region26: #{tpu_custom_call.1} parent=1 // pred_check
      _
    $region27: #{tpu_custom_call.1} parent=1 // pred_check_branch
      %57 = sbr.rel (0) target = $region29
    $region28: #{tpu_custom_call.1} parent=1 // pred_region
      %58 = dma.done [#allocation8], 512
    $region29: #{tpu_custom_call.1} parent=1 // pred_fallthru
      _
    // Predicated region
    $region30: #{tpu_custom_call.1} parent=1 // pred_check
      _
    $region31: #{tpu_custom_call.1} parent=1 // pred_check_branch
      %60 = sbr.rel (0) target = $region33
    $region32: #{tpu_custom_call.1} parent=1 // pred_region
      %61 = dma.done [#allocation8], 1024
    $region33: #{tpu_custom_call.1} parent=1 // pred_fallthru
      _
    %v63 = vld [vmem:[#allocation4] sm:$0xff]
    %v64 = vtanh.pop %v63
    %v65 = vpack.c.bf16 %v64, %v64
    %v66 = vld [vmem:[#allocation7] sm:$0xf]
    %v67 = vld [vmem:[#allocation7 + $0x4] sm:$0xf]
    %v68 = vld [vmem:[#allocation7 + $0x8] sm:$0xf]
    %v69 = vld [vmem:[#allocation7 + $0xc] sm:$0xf]
    %v70 = vld [vmem:[#allocation7 + $0x10] sm:$0xf]
    %v71 = vld [vmem:[#allocation7 + $0x14] sm:$0xf]
    %v72 = vld [vmem:[#allocation7 + $0x18] sm:$0xf]
    %v73 = vld [vmem:[#allocation7 + $0x1c] sm:$0xf]
    %v74 = vld [vmem:[%s3] sm:$0x1]
    %v76 = vlaneseq
    %v77 = vshrl.u32 %v76, 7
    %v78 = vsub.s32 0, %v77
    %v79 = vrot.slane %v74, %v78
    %v89 = vunpack.c.l.b16 %v66
    %v90 = vunpack.c.l.b16 %v67
    %v91 = vunpack.c.l.b16 %v68
    %v92 = vunpack.c.l.b16 %v69
    %v93 = vunpack.c.l.b16 %v70
    %v94 = vunpack.c.l.b16 %v71
    %v95 = vunpack.c.l.b16 %v72
    %v96 = vunpack.c.l.b16 %v73
    %v97 = vpack.c.b16 %v90, %v89
    %v98 = vpack.c.b16 %v92, %v91
    %v99 = vpack.c.b16 %v94, %v93
    %v100 = vpack.c.b16 %v96, %v95
    %vm105 = vcmask 523264
    %v107 = vsel %vm105, %v65, 0
    %109 = vmatprep.subr.bf16.mxu0 0
    %110 = vmatpush1.bf16.msra.mxu0 0
    %111 = vmatprep.subr.bf16.mxu0 0
    %112 = vmatpush1.bf16.msra.mxu0 0
    %113 = vmatprep.subr.bf16.mxu0 0
    %114 = vmatpush1.bf16.msra.mxu0 0
    %115 = vmatprep.subr.bf16.mxu0 0
    %116 = vmatpush1.bf16.msra.mxu0 0
    %117 = vmatprep.subr.bf16.mxu0 0
    %118 = vmatpush1.bf16.msra.mxu0 %v100
    %119 = vmatprep.subr.bf16.mxu0 0
    %120 = vmatpush1.bf16.msra.mxu0 %v99
    %121 = vmatprep.subr.bf16.mxu0 0
    %122 = vmatpush1.bf16.msra.mxu0 %v98
    %123 = vmatprep.subr.bf16.mxu0 0
    %124 = vmatpush1.bf16.msra.mxu0 %v97
    %125 = vmatprep.subr.bf16.mxu0 0
    %126 = vmatpush2.bf16.msra.mxu0 0
    %127 = vmatprep.subr.bf16.mxu0 0
    %128 = vmatpush2.bf16.msra.mxu0 0
    %129 = vmatprep.subr.bf16.mxu0 0
    %130 = vmatpush2.bf16.msra.mxu0 0
    %131 = vmatprep.subr.bf16.mxu0 0
    %132 = vmatpush2.bf16.msra.mxu0 0
    %133 = vmatprep.subr.bf16.mxu0 0
    %134 = vmatpush2.bf16.msra.mxu0 0
    %135 = vmatprep.subr.bf16.mxu0 0
    %136 = vmatpush2.bf16.msra.mxu0 0
    %137 = vmatprep.subr.bf16.mxu0 0
    %138 = vmatpush2.bf16.msra.mxu0 0
    %139 = vmatprep.subr.bf16.mxu0 0
    %140 = vmatpush2.bf16.msra.mxu0 0
    %141 = vmatprep.mubr.bf16.mxu0 0
    %142 = vmatmul.mubr.bf16.gmra.mxu0 %v107
    %v143 = vpop.f32.mrf.mxu0
    %v144 = vadd.f32 %v79, %v143
    %v145 = vpop.f32.mrf.mxu0
    %v146 = vpop.f32.mrf.mxu0
    %v147 = vpop.f32.mrf.mxu0
    %148 = vdwg.mxu0
    %v149 = vmax.f32 %v144, 0.0
    %v150 = vpack.c.bf16 %v149, %v149
    %v151 = vld [vmem:[#allocation9] sm:$0xf]
    %v152 = vld [vmem:[#allocation9 + $0x4] sm:$0xf]
    %v153 = vld [vmem:[#allocation9 + $0x8] sm:$0xf]
    %v154 = vld [vmem:[#allocation9 + $0xc] sm:$0xf]
    %v155 = vld [vmem:[#allocation9 + $0x10] sm:$0xf]
    %v156 = vld [vmem:[#allocation9 + $0x14] sm:$0xf]
    %v157 = vld [vmem:[#allocation9 + $0x18] sm:$0xf]
    %v158 = vld [vmem:[#allocation9 + $0x1c] sm:$0xf]
    %v159 = vld [vmem:[#allocation9 + $0x20] sm:$0xf]
    %v160 = vld [vmem:[#allocation9 + $0x24] sm:$0xf]
    %v161 = vld [vmem:[#allocation9 + $0x28] sm:$0xf]
    %v162 = vld [vmem:[#allocation9 + $0x2c] sm:$0xf]
    %v163 = vld [vmem:[#allocation9 + $0x30] sm:$0xf]
    %v164 = vld [vmem:[#allocation9 + $0x34] sm:$0xf]
    %v165 = vld [vmem:[#allocation9 + $0x38] sm:$0xf]
    %v166 = vld [vmem:[#allocation9 + $0x3c] sm:$0xf]
    %v167 = vld [vmem:[%s5] sm:$0x1]
    %v169 = vlaneseq
    %v170 = vshrl.u32 %v169, 7
    %v171 = vsub.s32 0, %v170
    %v172 = vrot.slane %v167, %v171
    %v190 = vunpack.c.l.b16 %v151
    %v191 = vunpack.c.l.b16 %v152
    %v192 = vunpack.c.l.b16 %v153
    %v193 = vunpack.c.l.b16 %v154
    %v194 = vunpack.c.l.b16 %v155
    %v195 = vunpack.c.l.b16 %v156
    %v196 = vunpack.c.l.b16 %v157
    %v197 = vunpack.c.l.b16 %v158
    %v198 = vunpack.c.l.b16 %v159
    %v199 = vunpack.c.l.b16 %v160
    %v200 = vunpack.c.l.b16 %v161
    %v201 = vunpack.c.l.b16 %v162
    %v202 = vunpack.c.l.b16 %v163
    %v203 = vunpack.c.l.b16 %v164
    %v204 = vunpack.c.l.b16 %v165
    %v205 = vunpack.c.l.b16 %v166
    %v206 = vpack.c.b16 %v191, %v190
    %v207 = vpack.c.b16 %v193, %v192
    %v208 = vpack.c.b16 %v195, %v194
    %v209 = vpack.c.b16 %v197, %v196
    %v210 = vpack.c.b16 %v199, %v198
    %v211 = vpack.c.b16 %v201, %v200
    %v212 = vpack.c.b16 %v203, %v202
    %v213 = vpack.c.b16 %v205, %v204
    %222 = vmatprep.subr.bf16.mxu0 0
    %223 = vmatpush1.bf16.msra.mxu0 %v213
    %224 = vmatprep.subr.bf16.mxu0 0
    %225 = vmatpush1.bf16.msra.mxu0 %v212
    %226 = vmatprep.subr.bf16.mxu0 0
    %227 = vmatpush1.bf16.msra.mxu0 %v211
    %228 = vmatprep.subr.bf16.mxu0 0
    %229 = vmatpush1.bf16.msra.mxu0 %v210
    %230 = vmatprep.subr.bf16.mxu0 0
    %231 = vmatpush1.bf16.msra.mxu0 %v209
    %232 = vmatprep.subr.bf16.mxu0 0
    %233 = vmatpush1.bf16.msra.mxu0 %v208
    %234 = vmatprep.subr.bf16.mxu0 0
    %235 = vmatpush1.bf16.msra.mxu0 %v207
    %236 = vmatprep.subr.bf16.mxu0 0
    %237 = vmatpush1.bf16.msra.mxu0 %v206
    %238 = vmatprep.subr.bf16.mxu0 0
    %239 = vmatpush2.bf16.msra.mxu0 0
    %240 = vmatprep.subr.bf16.mxu0 0
    %241 = vmatpush2.bf16.msra.mxu0 0
    %242 = vmatprep.subr.bf16.mxu0 0
    %243 = vmatpush2.bf16.msra.mxu0 0
    %244 = vmatprep.subr.bf16.mxu0 0
    %245 = vmatpush2.bf16.msra.mxu0 0
    %246 = vmatprep.subr.bf16.mxu0 0
    %247 = vmatpush2.bf16.msra.mxu0 0
    %248 = vmatprep.subr.bf16.mxu0 0
    %249 = vmatpush2.bf16.msra.mxu0 0
    %250 = vmatprep.subr.bf16.mxu0 0
    %251 = vmatpush2.bf16.msra.mxu0 0
    %252 = vmatprep.subr.bf16.mxu0 0
    %253 = vmatpush2.bf16.msra.mxu0 0
    %254 = vmatprep.mubr.bf16.mxu0 0
    %255 = vmatmul.mubr.bf16.gmra.mxu0 %v150
    %v256 = vpop.f32.mrf.mxu0
    %v257 = vadd.f32 %v172, %v256
    %v258 = vpop.f32.mrf.mxu0
    %v259 = vpop.f32.mrf.mxu0
    %v260 = vpop.f32.mrf.mxu0
    %261 = vdwg.mxu0
    %262 = vst [vmem:[#allocation10] sm:$0xff] %v257
    // Predicated region
    $region34: #{tpu_custom_call.1} parent=1 // pred_check
      _
    $region35: #{tpu_custom_call.1} parent=1 // pred_check_branch
      %264 = sbr.rel (0) target = $region37
    $region36: #{tpu_custom_call.1} parent=1 // pred_region
      %s266 = ssub.s32 128, 128
      %267 = vsyncadd [#allocation6], %s266
      %s269 = sshll.u32 [#allocation10], 4
      %s270 = int_to_ptr.vmem [resolvable:$true] %s269
      %272 = dma.vmem_to_hbm [thread:$0]  %s270, 128, %s6, [#allocation6]
    $region37: #{tpu_custom_call.1} parent=1 // pred_fallthru
      _
    // Predicated region
    $region38: #{tpu_custom_call.1} parent=1 // pred_check
      _
    $region39: #{tpu_custom_call.1} parent=1 // pred_check_branch
      %274 = sbr.rel (0) target = $region41
    $region40: #{tpu_custom_call.1} parent=1 // pred_region
      %275 = dma.done [#allocation6], 128
    $region41: #{tpu_custom_call.1} parent=1 // pred_fallthru
      _
    %276 = vsyncpa [#allocation5], 1
    %277 = vsyncpa [#allocation8], 1
    %278 = vsyncpa [#allocation6], 1

</llo_original>
